<compile_context>
chip_gen: v7x
topology: tpu7x:2x2x1
jax: 0.10.0
libtpu: 0.0.40
codegen_flags: <defaults>
</compile_context>

<pallas_src>
import functools

import numpy as np
import jax
import jax.numpy as jnp
from jax.experimental import pallas as pl
from jax.experimental.pallas import tpu as pltpu


def _round_up(x, m):
    return ((x + m - 1) // m) * m


def _pick_seq_tile(S, max_tile, mult):
    """Largest multiple of `mult` (<= max_tile) minimizing sequence padding."""
    s_pad_min = _round_up(S, mult)
    cap = max(mult, min((max_tile // mult) * mult, s_pad_min))
    best_ts, best_pad = mult, s_pad_min - S
    for t in range(mult, cap + 1, mult):
        pad = _round_up(S, t) - S
        if pad < best_pad or (pad == best_pad and t > best_ts):
            best_ts, best_pad = t, pad
    return best_ts


def _embed_gather_kernel(S_pad, Ts, ids_ref, embed_hbm, pos_ref, out_ref,
                         gather_vmem, sems):
    """One grid step (sj, b): gather Ts embedding rows + add the PE tile.

    ids_ref    : (B*S_pad,) int32, SMEM (scalar prefetch)
    embed_hbm  : (V, E) embedding table, left in HBM (memory_space=pl.ANY)
    pos_ref    : (Ts, E) positional tile (auto-pipelined, reused across batch)
    out_ref    : (Ts, E) output tile of the flat (B*S_pad, E) slab
    gather_vmem: (2, Ts, E) VMEM double buffer for the gathered rows
    sems       : (2,) DMA semaphores (one per buffer slot)
    """
    sj = pl.program_id(0)           # sequence-tile index (outer, "parallel")
    b = pl.program_id(1)            # batch index        (inner, "arbitrary")
    nb = pl.num_programs(1)
    slot = b % 2

    def issue(batch_idx, slot_idx):
        base = batch_idx * S_pad + sj * Ts
        # Fully unrolled: lets the LLO scheduler overlap the scalar SMEM id loads
        # with DMA-descriptor issue instead of a rolled dynamic loop.
        for t in range(Ts):
            row = ids_ref[base + t]
            pltpu.make_async_copy(
                embed_hbm.at[pl.ds(row, 1)],            # (1, E) HBM source row
                gather_vmem.at[slot_idx, pl.ds(t, 1)],  # (1, E) VMEM dest row
                sems.at[slot_idx],
            ).start()

    def wait_all(slot_idx):
        # All Ts row copies of a slot signal the SAME semaphore; wait per copy
        # (same pattern as the reference paged-attention kernel).  Only the
        # descriptor size/dest matter for wait accounting.
        for t in range(Ts):
            pltpu.make_async_copy(
                embed_hbm.at[pl.ds(0, 1)],
                gather_vmem.at[slot_idx, pl.ds(t, 1)],
                sems.at[slot_idx],
            ).wait()

    # Prime the double buffer at the start of every batch sweep.  The inner grid
    # axis is "arbitrary", so whichever core owns this sequence tile runs
    # b = 0..B-1 sequentially and always re-primes here (megacore-safe).
    @pl.when(b == 0)
    def _():
        issue(b, slot)

    # Wait for this step's gather ...
    wait_all(slot)

    # ... then immediately start the next batch row's gather into the other slot
    # so it overlaps with this step's add and the pipelined output writeback.
    @pl.when(b + 1 < nb)
    def _():
        issue(b + 1, 1 - slot)

    # token embedding + positional encoding; dropout is eval-mode identity.
    # TODO(synk): train-mode dropout (pltpu.prng_seed + prng_random_bits) not implemented.
    out_ref[...] = gather_vmem[slot] + pos_ref[...]


def transformer_embedding(input_ids, embed_table, pos_table, *, seq_tile=256):
    """token_embed(input_ids) + pe[:, :S]   (dropout = identity / eval mode)."""
    B, S = input_ids.shape
    V, E = embed_table.shape
    max_len = pos_table.shape[0]
    if S > max_len:
        raise ValueError(f"seq_len {S} exceeds positional-encoding max_len {max_len}")

    itemsize = jnp.dtype(embed_table.dtype).itemsize
    sub_mult = 8 * max(1, 4 // itemsize)       # min sublane multiple: f32->8, bf16->16
    Ts = _pick_seq_tile(S, seq_tile, sub_mult)
    S_pad = _round_up(S, Ts)
    num_s_tiles = S_pad // Ts

    # Flatten ids to 1-D (cheap SMEM layout), pad the sequence, and clamp so an
    # out-of-range id (UB in torch too) can never produce an out-of-bounds DMA.
    ids = jnp.clip(input_ids.astype(jnp.int32), 0, V - 1)
    if S_pad > S:
        ids = jnp.pad(ids, ((0, 0), (0, S_pad - S)))
    ids_flat = ids.reshape(B * S_pad)

    # Positional slab (S_pad, E): rows [0, S) of the PE table; padded rows are
    # sliced away from the output anyway.
    pos_slab = pos_table[:S].astype(embed_table.dtype)
    if S_pad > S:
        pos_slab = jnp.pad(pos_slab, ((0, S_pad - S), (0, 0)))

    kernel = functools.partial(_embed_gather_kernel, S_pad, Ts)

    grid_spec = pltpu.PrefetchScalarGridSpec(
        num_scalar_prefetch=1,              # ids_flat -> SMEM
        # Outer axis = sequence tiles (parallel / megacore-shardable); inner axis =
        # batch (arbitrary: double-buffer state is carried across it).
        grid=(num_s_tiles, B),
        in_specs=[
            pl.BlockSpec(memory_space=pl.ANY),                      # embedding table (HBM)
            pl.BlockSpec((Ts, E), lambda sj, b, ids: (sj, 0)),      # PE tile (reused over batch)
        ],
        out_specs=pl.BlockSpec(                                     # flat (B*S_pad, E) slab
            (Ts, E), lambda sj, b, ids: (b * num_s_tiles + sj, 0)),
        scratch_shapes=[
            pltpu.VMEM((2, Ts, E), embed_table.dtype),              # double-buffered gather
            pltpu.SemaphoreType.DMA((2,)),                          # one sem per slot
        ],
    )

    out_flat = pl.pallas_call(
        kernel,
        out_shape=jax.ShapeDtypeStruct((B * S_pad, E), embed_table.dtype),
        grid_spec=grid_spec,
        compiler_params=pltpu.CompilerParams(
            dimension_semantics=("parallel", "arbitrary")),
        cost_estimate=pl.CostEstimate(
            flops=B * S_pad * E,
            transcendentals=0,
            bytes_accessed=(2 * B * S_pad * E + S_pad * E) * itemsize + 4 * B * S_pad),
    )(ids_flat, embed_table, pos_slab)

    out = out_flat.reshape(B, S_pad, E)
    if S_pad > S:
        out = out[:, :S, :]
    return out


def make_positional_encoding(embed_dim, max_len):
    # Exactly mirrors PositionalEncoding.__init__ from the PyTorch module.
    lookup = np.array(
        [[pos / np.power(10000, 2 * (i // 2) / embed_dim) for i in range(embed_dim)]
         for pos in range(max_len)]
    )
    lookup[:, 0::2] = np.sin(lookup[:, 0::2])
    lookup[:, 1::2] = np.cos(lookup[:, 1::2])
    return jnp.asarray(lookup, dtype=jnp.float32)


if __name__ == "__main__":
    # Module hyper-parameters (small, lane-friendly embed_dim).
    vocab_size, embed_dim, pad_idx, max_len, dropout_prob = 32, 128, 0, 16, 0.1
    B, S = 2, 8

    key = jax.random.PRNGKey(0)
    k_emb, k_ids = jax.random.split(key)

    # nn.Embedding: N(0,1) init, padding_idx row zeroed.
    embed_table = jax.random.normal(k_emb, (vocab_size, embed_dim), dtype=jnp.float32)
    embed_table = embed_table.at[pad_idx].set(0.0)

    pos_table = make_positional_encoding(embed_dim, max_len)

    input_ids = jax.random.randint(k_ids, (B, S), 0, vocab_size, dtype=jnp.int32)

    out = transformer_embedding(input_ids, embed_table, pos_table)
    out = jax.block_until_ready(out)

    # Reference (plain JAX) check.
    ref = embed_table[input_ids] + pos_table[None, :S, :]
    assert out.shape == (B, S, embed_dim)
    np.testing.assert_allclose(np.asarray(out), np.asarray(ref), rtol=1e-6, atol=1e-6)

    # Also exercise the padded / multi-sequence-tile path (S not a multiple of the
    # tile, num_s_tiles > 1) to validate the adaptive tiling + double buffering.
    S2 = 13
    input_ids2 = jax.random.randint(jax.random.PRNGKey(1), (B, S2), 0, vocab_size,
                                    dtype=jnp.int32)
    out2 = jax.block_until_ready(
        transformer_embedding(input_ids2, embed_table, pos_table, seq_tile=8))
    ref2 = embed_table[input_ids2] + pos_table[None, :S2, :]
    assert out2.shape == (B, S2, embed_dim)
    np.testing.assert_allclose(np.asarray(out2), np.asarray(ref2), rtol=1e-6, atol=1e-6)

    print("KERNEL_OK")
</pallas_src>

<mosaic_0001>
module attributes {stable_mosaic.version = 11 : i64} {
  func.func @_embed_gather_kernel(%arg0: i32, %arg1: i32, %arg2: memref<16xi32, #tpu.memory_space<smem>>, %arg3: memref<32x128xf32, #tpu.memory_space<any>>, %arg4: memref<8x128xf32, #tpu.memory_space<vmem>>, %arg5: memref<8x128xf32, #tpu.memory_space<vmem>>, %arg6: memref<2x8x128xf32, #tpu.memory_space<vmem>>, %arg7: memref<2x!tpu.dma_semaphore, #tpu.memory_space<semaphore_mem>>) attributes {dimension_semantics = [#tpu.dimension_semantics<parallel>, #tpu.dimension_semantics<arbitrary>], iteration_bounds = array<i64: 1, 2>, scalar_prefetch = 1 : i64, scratch_operands = 2 : i64, tpu.core_type = #tpu.core_type<tc>, window_params = [{}, {transform_indices = @transform_1, window_bounds = array<i64: 8, 128>}, {transform_indices = @transform_2, window_bounds = array<i64: 8, 128>}]} {
    %c2_i32 = arith.constant 2 : i32
    %c0_i32 = arith.constant 0 : i32
    %0 = arith.cmpi eq, %c2_i32, %c0_i32 : i32
    %c1_i32 = arith.constant 1 : i32
    %1 = arith.select %0, %c1_i32, %c2_i32 : i32
    %2 = arith.remsi %arg1, %1 : i32
    %c0_i32_0 = arith.constant 0 : i32
    %3 = arith.cmpi ne, %2, %c0_i32_0 : i32
    %c0_i32_1 = arith.constant 0 : i32
    %4 = arith.cmpi slt, %2, %c0_i32_1 : i32
    %c0_i32_2 = arith.constant 0 : i32
    %5 = arith.cmpi slt, %1, %c0_i32_2 : i32
    %6 = arith.xori %4, %5 : i1
    %7 = arith.andi %6, %3 : i1
    %8 = arith.addi %2, %1 : i32
    %9 = arith.select %7, %8, %2 : i32
    %c0_i32_3 = arith.constant 0 : i32
    %10 = arith.cmpi eq, %arg1, %c0_i32_3 : i32
    %11 = arith.extui %10 : i1 to i32
    %c0_i32_4 = arith.constant 0 : i32
    %12 = arith.cmpi ne, %11, %c0_i32_4 : i32
    scf.if %12 {
      %c8_i32 = arith.constant 8 : i32
      %63 = arith.muli %arg1, %c8_i32 : i32
      %c8_i32_40 = arith.constant 8 : i32
      %64 = arith.muli %arg0, %c8_i32_40 : i32
      %65 = arith.addi %63, %64 : i32
      %c0_i32_41 = arith.constant 0 : i32
      %66 = arith.addi %65, %c0_i32_41 : i32
      %67 = arith.index_cast %66 : i32 to index
      %68 = memref.load %arg2[%67] : memref<16xi32, #tpu.memory_space<smem>>
      %c0_i32_42 = arith.constant 0 : i32
      %69 = tpu.memref_slice %arg3[%68, %c0_i32_42] : memref<32x128xf32, #tpu.memory_space<any>> -> memref<1x128xf32, #tpu.memory_space<any>>
      %c0_i32_43 = arith.constant 0 : i32
      %c0_i32_44 = arith.constant 0 : i32
      %70 = tpu.memref_slice %arg6[%9, %c0_i32_43, %c0_i32_44] : memref<2x8x128xf32, #tpu.memory_space<vmem>> -> memref<1x1x128xf32, #tpu.memory_space<vmem>>
      %71 = tpu.memref_squeeze %70 : memref<1x1x128xf32, #tpu.memory_space<vmem>> -> memref<1x128xf32, #tpu.memory_space<vmem>>
      %72 = tpu.memref_slice %arg7[%9] : memref<2x!tpu.dma_semaphore, #tpu.memory_space<semaphore_mem>> -> memref<1x!tpu.dma_semaphore, #tpu.memory_space<semaphore_mem>>
      %73 = tpu.memref_squeeze %72 : memref<1x!tpu.dma_semaphore, #tpu.memory_space<semaphore_mem>> -> memref<!tpu.dma_semaphore, #tpu.memory_space<semaphore_mem>>
      tpu.enqueue_dma source(%69 : memref<1x128xf32, #tpu.memory_space<any>>) target(%71 : memref<1x128xf32, #tpu.memory_space<vmem>>) target_semaphore(%73 : memref<!tpu.dma_semaphore, #tpu.memory_space<semaphore_mem>>)
      %c1_i32_45 = arith.constant 1 : i32
      %74 = arith.addi %65, %c1_i32_45 : i32
      %75 = arith.index_cast %74 : i32 to index
      %76 = memref.load %arg2[%75] : memref<16xi32, #tpu.memory_space<smem>>
      %c0_i32_46 = arith.constant 0 : i32
      %77 = tpu.memref_slice %arg3[%76, %c0_i32_46] : memref<32x128xf32, #tpu.memory_space<any>> -> memref<1x128xf32, #tpu.memory_space<any>>
      %c1_i32_47 = arith.constant 1 : i32
      %c0_i32_48 = arith.constant 0 : i32
      %78 = tpu.memref_slice %arg6[%9, %c1_i32_47, %c0_i32_48] : memref<2x8x128xf32, #tpu.memory_space<vmem>> -> memref<1x1x128xf32, #tpu.memory_space<vmem>>
      %79 = tpu.memref_squeeze %78 : memref<1x1x128xf32, #tpu.memory_space<vmem>> -> memref<1x128xf32, #tpu.memory_space<vmem>>
      %80 = tpu.memref_slice %arg7[%9] : memref<2x!tpu.dma_semaphore, #tpu.memory_space<semaphore_mem>> -> memref<1x!tpu.dma_semaphore, #tpu.memory_space<semaphore_mem>>
      %81 = tpu.memref_squeeze %80 : memref<1x!tpu.dma_semaphore, #tpu.memory_space<semaphore_mem>> -> memref<!tpu.dma_semaphore, #tpu.memory_space<semaphore_mem>>
      tpu.enqueue_dma source(%77 : memref<1x128xf32, #tpu.memory_space<any>>) target(%79 : memref<1x128xf32, #tpu.memory_space<vmem>>) target_semaphore(%81 : memref<!tpu.dma_semaphore, #tpu.memory_space<semaphore_mem>>)
      %c2_i32_49 = arith.constant 2 : i32
      %82 = arith.addi %65, %c2_i32_49 : i32
      %83 = arith.index_cast %82 : i32 to index
      %84 = memref.load %arg2[%83] : memref<16xi32, #tpu.memory_space<smem>>
      %c0_i32_50 = arith.constant 0 : i32
      %85 = tpu.memref_slice %arg3[%84, %c0_i32_50] : memref<32x128xf32, #tpu.memory_space<any>> -> memref<1x128xf32, #tpu.memory_space<any>>
      %c2_i32_51 = arith.constant 2 : i32
      %c0_i32_52 = arith.constant 0 : i32
      %86 = tpu.memref_slice %arg6[%9, %c2_i32_51, %c0_i32_52] : memref<2x8x128xf32, #tpu.memory_space<vmem>> -> memref<1x1x128xf32, #tpu.memory_space<vmem>>
      %87 = tpu.memref_squeeze %86 : memref<1x1x128xf32, #tpu.memory_space<vmem>> -> memref<1x128xf32, #tpu.memory_space<vmem>>
      %88 = tpu.memref_slice %arg7[%9] : memref<2x!tpu.dma_semaphore, #tpu.memory_space<semaphore_mem>> -> memref<1x!tpu.dma_semaphore, #tpu.memory_space<semaphore_mem>>
      %89 = tpu.memref_squeeze %88 : memref<1x!tpu.dma_semaphore, #tpu.memory_space<semaphore_mem>> -> memref<!tpu.dma_semaphore, #tpu.memory_space<semaphore_mem>>
      tpu.enqueue_dma source(%85 : memref<1x128xf32, #tpu.memory_space<any>>) target(%87 : memref<1x128xf32, #tpu.memory_space<vmem>>) target_semaphore(%89 : memref<!tpu.dma_semaphore, #tpu.memory_space<semaphore_mem>>)
      %c3_i32_53 = arith.constant 3 : i32
      %90 = arith.addi %65, %c3_i32_53 : i32
      %91 = arith.index_cast %90 : i32 to index
      %92 = memref.load %arg2[%91] : memref<16xi32, #tpu.memory_space<smem>>
      %c0_i32_54 = arith.constant 0 : i32
      %93 = tpu.memref_slice %arg3[%92, %c0_i32_54] : memref<32x128xf32, #tpu.memory_space<any>> -> memref<1x128xf32, #tpu.memory_space<any>>
      %c3_i32_55 = arith.constant 3 : i32
      %c0_i32_56 = arith.constant 0 : i32
      %94 = tpu.memref_slice %arg6[%9, %c3_i32_55, %c0_i32_56] : memref<2x8x128xf32, #tpu.memory_space<vmem>> -> memref<1x1x128xf32, #tpu.memory_space<vmem>>
      %95 = tpu.memref_squeeze %94 : memref<1x1x128xf32, #tpu.memory_space<vmem>> -> memref<1x128xf32, #tpu.memory_space<vmem>>
      %96 = tpu.memref_slice %arg7[%9] : memref<2x!tpu.dma_semaphore, #tpu.memory_space<semaphore_mem>> -> memref<1x!tpu.dma_semaphore, #tpu.memory_space<semaphore_mem>>
      %97 = tpu.memref_squeeze %96 : memref<1x!tpu.dma_semaphore, #tpu.memory_space<semaphore_mem>> -> memref<!tpu.dma_semaphore, #tpu.memory_space<semaphore_mem>>
      tpu.enqueue_dma source(%93 : memref<1x128xf32, #tpu.memory_space<any>>) target(%95 : memref<1x128xf32, #tpu.memory_space<vmem>>) target_semaphore(%97 : memref<!tpu.dma_semaphore, #tpu.memory_space<semaphore_mem>>)
      %c4_i32_57 = arith.constant 4 : i32
      %98 = arith.addi %65, %c4_i32_57 : i32
      %99 = arith.index_cast %98 : i32 to index
      %100 = memref.load %arg2[%99] : memref<16xi32, #tpu.memory_space<smem>>
      %c0_i32_58 = arith.constant 0 : i32
      %101 = tpu.memref_slice %arg3[%100, %c0_i32_58] : memref<32x128xf32, #tpu.memory_space<any>> -> memref<1x128xf32, #tpu.memory_space<any>>
      %c4_i32_59 = arith.constant 4 : i32
      %c0_i32_60 = arith.constant 0 : i32
      %102 = tpu.memref_slice %arg6[%9, %c4_i32_59, %c0_i32_60] : memref<2x8x128xf32, #tpu.memory_space<vmem>> -> memref<1x1x128xf32, #tpu.memory_space<vmem>>
      %103 = tpu.memref_squeeze %102 : memref<1x1x128xf32, #tpu.memory_space<vmem>> -> memref<1x128xf32, #tpu.memory_space<vmem>>
      %104 = tpu.memref_slice %arg7[%9] : memref<2x!tpu.dma_semaphore, #tpu.memory_space<semaphore_mem>> -> memref<1x!tpu.dma_semaphore, #tpu.memory_space<semaphore_mem>>
      %105 = tpu.memref_squeeze %104 : memref<1x!tpu.dma_semaphore, #tpu.memory_space<semaphore_mem>> -> memref<!tpu.dma_semaphore, #tpu.memory_space<semaphore_mem>>
      tpu.enqueue_dma source(%101 : memref<1x128xf32, #tpu.memory_space<any>>) target(%103 : memref<1x128xf32, #tpu.memory_space<vmem>>) target_semaphore(%105 : memref<!tpu.dma_semaphore, #tpu.memory_space<semaphore_mem>>)
      %c5_i32_61 = arith.constant 5 : i32
      %106 = arith.addi %65, %c5_i32_61 : i32
      %107 = arith.index_cast %106 : i32 to index
      %108 = memref.load %arg2[%107] : memref<16xi32, #tpu.memory_space<smem>>
      %c0_i32_62 = arith.constant 0 : i32
      %109 = tpu.memref_slice %arg3[%108, %c0_i32_62] : memref<32x128xf32, #tpu.memory_space<any>> -> memref<1x128xf32, #tpu.memory_space<any>>
      %c5_i32_63 = arith.constant 5 : i32
      %c0_i32_64 = arith.constant 0 : i32
      %110 = tpu.memref_slice %arg6[%9, %c5_i32_63, %c0_i32_64] : memref<2x8x128xf32, #tpu.memory_space<vmem>> -> memref<1x1x128xf32, #tpu.memory_space<vmem>>
      %111 = tpu.memref_squeeze %110 : memref<1x1x128xf32, #tpu.memory_space<vmem>> -> memref<1x128xf32, #tpu.memory_space<vmem>>
      %112 = tpu.memref_slice %arg7[%9] : memref<2x!tpu.dma_semaphore, #tpu.memory_space<semaphore_mem>> -> memref<1x!tpu.dma_semaphore, #tpu.memory_space<semaphore_mem>>
      %113 = tpu.memref_squeeze %112 : memref<1x!tpu.dma_semaphore, #tpu.memory_space<semaphore_mem>> -> memref<!tpu.dma_semaphore, #tpu.memory_space<semaphore_mem>>
      tpu.enqueue_dma source(%109 : memref<1x128xf32, #tpu.memory_space<any>>) target(%111 : memref<1x128xf32, #tpu.memory_space<vmem>>) target_semaphore(%113 : memref<!tpu.dma_semaphore, #tpu.memory_space<semaphore_mem>>)
      %c6_i32_65 = arith.constant 6 : i32
      %114 = arith.addi %65, %c6_i32_65 : i32
      %115 = arith.index_cast %114 : i32 to index
      %116 = memref.load %arg2[%115] : memref<16xi32, #tpu.memory_space<smem>>
      %c0_i32_66 = arith.constant 0 : i32
      %117 = tpu.memref_slice %arg3[%116, %c0_i32_66] : memref<32x128xf32, #tpu.memory_space<any>> -> memref<1x128xf32, #tpu.memory_space<any>>
      %c6_i32_67 = arith.constant 6 : i32
      %c0_i32_68 = arith.constant 0 : i32
      %118 = tpu.memref_slice %arg6[%9, %c6_i32_67, %c0_i32_68] : memref<2x8x128xf32, #tpu.memory_space<vmem>> -> memref<1x1x128xf32, #tpu.memory_space<vmem>>
      %119 = tpu.memref_squeeze %118 : memref<1x1x128xf32, #tpu.memory_space<vmem>> -> memref<1x128xf32, #tpu.memory_space<vmem>>
      %120 = tpu.memref_slice %arg7[%9] : memref<2x!tpu.dma_semaphore, #tpu.memory_space<semaphore_mem>> -> memref<1x!tpu.dma_semaphore, #tpu.memory_space<semaphore_mem>>
      %121 = tpu.memref_squeeze %120 : memref<1x!tpu.dma_semaphore, #tpu.memory_space<semaphore_mem>> -> memref<!tpu.dma_semaphore, #tpu.memory_space<semaphore_mem>>
      tpu.enqueue_dma source(%117 : memref<1x128xf32, #tpu.memory_space<any>>) target(%119 : memref<1x128xf32, #tpu.memory_space<vmem>>) target_semaphore(%121 : memref<!tpu.dma_semaphore, #tpu.memory_space<semaphore_mem>>)
      %c7_i32_69 = arith.constant 7 : i32
      %122 = arith.addi %65, %c7_i32_69 : i32
      %123 = arith.index_cast %122 : i32 to index
      %124 = memref.load %arg2[%123] : memref<16xi32, #tpu.memory_space<smem>>
      %c0_i32_70 = arith.constant 0 : i32
      %125 = tpu.memref_slice %arg3[%124, %c0_i32_70] : memref<32x128xf32, #tpu.memory_space<any>> -> memref<1x128xf32, #tpu.memory_space<any>>
      %c7_i32_71 = arith.constant 7 : i32
      %c0_i32_72 = arith.constant 0 : i32
      %126 = tpu.memref_slice %arg6[%9, %c7_i32_71, %c0_i32_72] : memref<2x8x128xf32, #tpu.memory_space<vmem>> -> memref<1x1x128xf32, #tpu.memory_space<vmem>>
      %127 = tpu.memref_squeeze %126 : memref<1x1x128xf32, #tpu.memory_space<vmem>> -> memref<1x128xf32, #tpu.memory_space<vmem>>
      %128 = tpu.memref_slice %arg7[%9] : memref<2x!tpu.dma_semaphore, #tpu.memory_space<semaphore_mem>> -> memref<1x!tpu.dma_semaphore, #tpu.memory_space<semaphore_mem>>
      %129 = tpu.memref_squeeze %128 : memref<1x!tpu.dma_semaphore, #tpu.memory_space<semaphore_mem>> -> memref<!tpu.dma_semaphore, #tpu.memory_space<semaphore_mem>>
      tpu.enqueue_dma source(%125 : memref<1x128xf32, #tpu.memory_space<any>>) target(%127 : memref<1x128xf32, #tpu.memory_space<vmem>>) target_semaphore(%129 : memref<!tpu.dma_semaphore, #tpu.memory_space<semaphore_mem>>)
    } else {
    }
    %c0_i32_5 = arith.constant 0 : i32
    %c0_i32_6 = arith.constant 0 : i32
    %13 = tpu.memref_slice %arg3[%c0_i32_5, %c0_i32_6] : memref<32x128xf32, #tpu.memory_space<any>> -> memref<1x128xf32, #tpu.memory_space<any>>
    %c0_i32_7 = arith.constant 0 : i32
    %c0_i32_8 = arith.constant 0 : i32
    %14 = tpu.memref_slice %arg6[%9, %c0_i32_7, %c0_i32_8] : memref<2x8x128xf32, #tpu.memory_space<vmem>> -> memref<1x1x128xf32, #tpu.memory_space<vmem>>
    %15 = tpu.memref_squeeze %14 : memref<1x1x128xf32, #tpu.memory_space<vmem>> -> memref<1x128xf32, #tpu.memory_space<vmem>>
    %16 = tpu.memref_slice %arg7[%9] : memref<2x!tpu.dma_semaphore, #tpu.memory_space<semaphore_mem>> -> memref<1x!tpu.dma_semaphore, #tpu.memory_space<semaphore_mem>>
    %17 = tpu.memref_squeeze %16 : memref<1x!tpu.dma_semaphore, #tpu.memory_space<semaphore_mem>> -> memref<!tpu.dma_semaphore, #tpu.memory_space<semaphore_mem>>
    tpu.wait_dma2 semaphore(%17 : memref<!tpu.dma_semaphore, #tpu.memory_space<semaphore_mem>>) src(%13 : memref<1x128xf32, #tpu.memory_space<any>>) dst(%15 : memref<1x128xf32, #tpu.memory_space<vmem>>)
    %c0_i32_9 = arith.constant 0 : i32
    %c0_i32_10 = arith.constant 0 : i32
    %18 = tpu.memref_slice %arg3[%c0_i32_9, %c0_i32_10] : memref<32x128xf32, #tpu.memory_space<any>> -> memref<1x128xf32, #tpu.memory_space<any>>
    %c1_i32_11 = arith.constant 1 : i32
    %c0_i32_12 = arith.constant 0 : i32
    %19 = tpu.memref_slice %arg6[%9, %c1_i32_11, %c0_i32_12] : memref<2x8x128xf32, #tpu.memory_space<vmem>> -> memref<1x1x128xf32, #tpu.memory_space<vmem>>
    %20 = tpu.memref_squeeze %19 : memref<1x1x128xf32, #tpu.memory_space<vmem>> -> memref<1x128xf32, #tpu.memory_space<vmem>>
    %21 = tpu.memref_slice %arg7[%9] : memref<2x!tpu.dma_semaphore, #tpu.memory_space<semaphore_mem>> -> memref<1x!tpu.dma_semaphore, #tpu.memory_space<semaphore_mem>>
    %22 = tpu.memref_squeeze %21 : memref<1x!tpu.dma_semaphore, #tpu.memory_space<semaphore_mem>> -> memref<!tpu.dma_semaphore, #tpu.memory_space<semaphore_mem>>
    tpu.wait_dma2 semaphore(%22 : memref<!tpu.dma_semaphore, #tpu.memory_space<semaphore_mem>>) src(%18 : memref<1x128xf32, #tpu.memory_space<any>>) dst(%20 : memref<1x128xf32, #tpu.memory_space<vmem>>)
    %c0_i32_13 = arith.constant 0 : i32
    %c0_i32_14 = arith.constant 0 : i32
    %23 = tpu.memref_slice %arg3[%c0_i32_13, %c0_i32_14] : memref<32x128xf32, #tpu.memory_space<any>> -> memref<1x128xf32, #tpu.memory_space<any>>
    %c2_i32_15 = arith.constant 2 : i32
    %c0_i32_16 = arith.constant 0 : i32
    %24 = tpu.memref_slice %arg6[%9, %c2_i32_15, %c0_i32_16] : memref<2x8x128xf32, #tpu.memory_space<vmem>> -> memref<1x1x128xf32, #tpu.memory_space<vmem>>
    %25 = tpu.memref_squeeze %24 : memref<1x1x128xf32, #tpu.memory_space<vmem>> -> memref<1x128xf32, #tpu.memory_space<vmem>>
    %26 = tpu.memref_slice %arg7[%9] : memref<2x!tpu.dma_semaphore, #tpu.memory_space<semaphore_mem>> -> memref<1x!tpu.dma_semaphore, #tpu.memory_space<semaphore_mem>>
    %27 = tpu.memref_squeeze %26 : memref<1x!tpu.dma_semaphore, #tpu.memory_space<semaphore_mem>> -> memref<!tpu.dma_semaphore, #tpu.memory_space<semaphore_mem>>
    tpu.wait_dma2 semaphore(%27 : memref<!tpu.dma_semaphore, #tpu.memory_space<semaphore_mem>>) src(%23 : memref<1x128xf32, #tpu.memory_space<any>>) dst(%25 : memref<1x128xf32, #tpu.memory_space<vmem>>)
    %c0_i32_17 = arith.constant 0 : i32
    %c0_i32_18 = arith.constant 0 : i32
    %28 = tpu.memref_slice %arg3[%c0_i32_17, %c0_i32_18] : memref<32x128xf32, #tpu.memory_space<any>> -> memref<1x128xf32, #tpu.memory_space<any>>
    %c3_i32 = arith.constant 3 : i32
    %c0_i32_19 = arith.constant 0 : i32
    %29 = tpu.memref_slice %arg6[%9, %c3_i32, %c0_i32_19] : memref<2x8x128xf32, #tpu.memory_space<vmem>> -> memref<1x1x128xf32, #tpu.memory_space<vmem>>
    %30 = tpu.memref_squeeze %29 : memref<1x1x128xf32, #tpu.memory_space<vmem>> -> memref<1x128xf32, #tpu.memory_space<vmem>>
    %31 = tpu.memref_slice %arg7[%9] : memref<2x!tpu.dma_semaphore, #tpu.memory_space<semaphore_mem>> -> memref<1x!tpu.dma_semaphore, #tpu.memory_space<semaphore_mem>>
    %32 = tpu.memref_squeeze %31 : memref<1x!tpu.dma_semaphore, #tpu.memory_space<semaphore_mem>> -> memref<!tpu.dma_semaphore, #tpu.memory_space<semaphore_mem>>
    tpu.wait_dma2 semaphore(%32 : memref<!tpu.dma_semaphore, #tpu.memory_space<semaphore_mem>>) src(%28 : memref<1x128xf32, #tpu.memory_space<any>>) dst(%30 : memref<1x128xf32, #tpu.memory_space<vmem>>)
    %c0_i32_20 = arith.constant 0 : i32
    %c0_i32_21 = arith.constant 0 : i32
    %33 = tpu.memref_slice %arg3[%c0_i32_20, %c0_i32_21] : memref<32x128xf32, #tpu.memory_space<any>> -> memref<1x128xf32, #tpu.memory_space<any>>
    %c4_i32 = arith.constant 4 : i32
    %c0_i32_22 = arith.constant 0 : i32
    %34 = tpu.memref_slice %arg6[%9, %c4_i32, %c0_i32_22] : memref<2x8x128xf32, #tpu.memory_space<vmem>> -> memref<1x1x128xf32, #tpu.memory_space<vmem>>
    %35 = tpu.memref_squeeze %34 : memref<1x1x128xf32, #tpu.memory_space<vmem>> -> memref<1x128xf32, #tpu.memory_space<vmem>>
    %36 = tpu.memref_slice %arg7[%9] : memref<2x!tpu.dma_semaphore, #tpu.memory_space<semaphore_mem>> -> memref<1x!tpu.dma_semaphore, #tpu.memory_space<semaphore_mem>>
    %37 = tpu.memref_squeeze %36 : memref<1x!tpu.dma_semaphore, #tpu.memory_space<semaphore_mem>> -> memref<!tpu.dma_semaphore, #tpu.memory_space<semaphore_mem>>
    tpu.wait_dma2 semaphore(%37 : memref<!tpu.dma_semaphore, #tpu.memory_space<semaphore_mem>>) src(%33 : memref<1x128xf32, #tpu.memory_space<any>>) dst(%35 : memref<1x128xf32, #tpu.memory_space<vmem>>)
    %c0_i32_23 = arith.constant 0 : i32
    %c0_i32_24 = arith.constant 0 : i32
    %38 = tpu.memref_slice %arg3[%c0_i32_23, %c0_i32_24] : memref<32x128xf32, #tpu.memory_space<any>> -> memref<1x128xf32, #tpu.memory_space<any>>
    %c5_i32 = arith.constant 5 : i32
    %c0_i32_25 = arith.constant 0 : i32
    %39 = tpu.memref_slice %arg6[%9, %c5_i32, %c0_i32_25] : memref<2x8x128xf32, #tpu.memory_space<vmem>> -> memref<1x1x128xf32, #tpu.memory_space<vmem>>
    %40 = tpu.memref_squeeze %39 : memref<1x1x128xf32, #tpu.memory_space<vmem>> -> memref<1x128xf32, #tpu.memory_space<vmem>>
    %41 = tpu.memref_slice %arg7[%9] : memref<2x!tpu.dma_semaphore, #tpu.memory_space<semaphore_mem>> -> memref<1x!tpu.dma_semaphore, #tpu.memory_space<semaphore_mem>>
    %42 = tpu.memref_squeeze %41 : memref<1x!tpu.dma_semaphore, #tpu.memory_space<semaphore_mem>> -> memref<!tpu.dma_semaphore, #tpu.memory_space<semaphore_mem>>
    tpu.wait_dma2 semaphore(%42 : memref<!tpu.dma_semaphore, #tpu.memory_space<semaphore_mem>>) src(%38 : memref<1x128xf32, #tpu.memory_space<any>>) dst(%40 : memref<1x128xf32, #tpu.memory_space<vmem>>)
    %c0_i32_26 = arith.constant 0 : i32
    %c0_i32_27 = arith.constant 0 : i32
    %43 = tpu.memref_slice %arg3[%c0_i32_26, %c0_i32_27] : memref<32x128xf32, #tpu.memory_space<any>> -> memref<1x128xf32, #tpu.memory_space<any>>
    %c6_i32 = arith.constant 6 : i32
    %c0_i32_28 = arith.constant 0 : i32
    %44 = tpu.memref_slice %arg6[%9, %c6_i32, %c0_i32_28] : memref<2x8x128xf32, #tpu.memory_space<vmem>> -> memref<1x1x128xf32, #tpu.memory_space<vmem>>
    %45 = tpu.memref_squeeze %44 : memref<1x1x128xf32, #tpu.memory_space<vmem>> -> memref<1x128xf32, #tpu.memory_space<vmem>>
    %46 = tpu.memref_slice %arg7[%9] : memref<2x!tpu.dma_semaphore, #tpu.memory_space<semaphore_mem>> -> memref<1x!tpu.dma_semaphore, #tpu.memory_space<semaphore_mem>>
    %47 = tpu.memref_squeeze %46 : memref<1x!tpu.dma_semaphore, #tpu.memory_space<semaphore_mem>> -> memref<!tpu.dma_semaphore, #tpu.memory_space<semaphore_mem>>
    tpu.wait_dma2 semaphore(%47 : memref<!tpu.dma_semaphore, #tpu.memory_space<semaphore_mem>>) src(%43 : memref<1x128xf32, #tpu.memory_space<any>>) dst(%45 : memref<1x128xf32, #tpu.memory_space<vmem>>)
    %c0_i32_29 = arith.constant 0 : i32
    %c0_i32_30 = arith.constant 0 : i32
    %48 = tpu.memref_slice %arg3[%c0_i32_29, %c0_i32_30] : memref<32x128xf32, #tpu.memory_space<any>> -> memref<1x128xf32, #tpu.memory_space<any>>
    %c7_i32 = arith.constant 7 : i32
    %c0_i32_31 = arith.constant 0 : i32
    %49 = tpu.memref_slice %arg6[%9, %c7_i32, %c0_i32_31] : memref<2x8x128xf32, #tpu.memory_space<vmem>> -> memref<1x1x128xf32, #tpu.memory_space<vmem>>
    %50 = tpu.memref_squeeze %49 : memref<1x1x128xf32, #tpu.memory_space<vmem>> -> memref<1x128xf32, #tpu.memory_space<vmem>>
    %51 = tpu.memref_slice %arg7[%9] : memref<2x!tpu.dma_semaphore, #tpu.memory_space<semaphore_mem>> -> memref<1x!tpu.dma_semaphore, #tpu.memory_space<semaphore_mem>>
    %52 = tpu.memref_squeeze %51 : memref<1x!tpu.dma_semaphore, #tpu.memory_space<semaphore_mem>> -> memref<!tpu.dma_semaphore, #tpu.memory_space<semaphore_mem>>
    tpu.wait_dma2 semaphore(%52 : memref<!tpu.dma_semaphore, #tpu.memory_space<semaphore_mem>>) src(%48 : memref<1x128xf32, #tpu.memory_space<any>>) dst(%50 : memref<1x128xf32, #tpu.memory_space<vmem>>)
    %c1_i32_32 = arith.constant 1 : i32
    %53 = arith.addi %arg1, %c1_i32_32 : i32
    %c2_i32_33 = arith.constant 2 : i32
    %54 = arith.cmpi slt, %53, %c2_i32_33 : i32
    %55 = arith.extui %54 : i1 to i32
    %c0_i32_34 = arith.constant 0 : i32
    %56 = arith.cmpi ne, %55, %c0_i32_34 : i32
    scf.if %56 {
      %c1_i32_40 = arith.constant 1 : i32
      %63 = arith.addi %arg1, %c1_i32_40 : i32
      %c1_i32_41 = arith.constant 1 : i32
      %64 = arith.subi %c1_i32_41, %9 : i32
      %c8_i32 = arith.constant 8 : i32
      %65 = arith.muli %63, %c8_i32 : i32
      %c8_i32_42 = arith.constant 8 : i32
      %66 = arith.muli %arg0, %c8_i32_42 : i32
      %67 = arith.addi %65, %66 : i32
      %c0_i32_43 = arith.constant 0 : i32
      %68 = arith.addi %67, %c0_i32_43 : i32
      %69 = arith.index_cast %68 : i32 to index
      %70 = memref.load %arg2[%69] : memref<16xi32, #tpu.memory_space<smem>>
      %c0_i32_44 = arith.constant 0 : i32
      %71 = tpu.memref_slice %arg3[%70, %c0_i32_44] : memref<32x128xf32, #tpu.memory_space<any>> -> memref<1x128xf32, #tpu.memory_space<any>>
      %c0_i32_45 = arith.constant 0 : i32
      %c0_i32_46 = arith.constant 0 : i32
      %72 = tpu.memref_slice %arg6[%64, %c0_i32_45, %c0_i32_46] : memref<2x8x128xf32, #tpu.memory_space<vmem>> -> memref<1x1x128xf32, #tpu.memory_space<vmem>>
      %73 = tpu.memref_squeeze %72 : memref<1x1x128xf32, #tpu.memory_space<vmem>> -> memref<1x128xf32, #tpu.memory_space<vmem>>
      %74 = tpu.memref_slice %arg7[%64] : memref<2x!tpu.dma_semaphore, #tpu.memory_space<semaphore_mem>> -> memref<1x!tpu.dma_semaphore, #tpu.memory_space<semaphore_mem>>
      %75 = tpu.memref_squeeze %74 : memref<1x!tpu.dma_semaphore, #tpu.memory_space<semaphore_mem>> -> memref<!tpu.dma_semaphore, #tpu.memory_space<semaphore_mem>>
      tpu.enqueue_dma source(%71 : memref<1x128xf32, #tpu.memory_space<any>>) target(%73 : memref<1x128xf32, #tpu.memory_space<vmem>>) target_semaphore(%75 : memref<!tpu.dma_semaphore, #tpu.memory_space<semaphore_mem>>)
      %c1_i32_47 = arith.constant 1 : i32
      %76 = arith.addi %67, %c1_i32_47 : i32
      %77 = arith.index_cast %76 : i32 to index
      %78 = memref.load %arg2[%77] : memref<16xi32, #tpu.memory_space<smem>>
      %c0_i32_48 = arith.constant 0 : i32
      %79 = tpu.memref_slice %arg3[%78, %c0_i32_48] : memref<32x128xf32, #tpu.memory_space<any>> -> memref<1x128xf32, #tpu.memory_space<any>>
      %c1_i32_49 = arith.constant 1 : i32
      %c0_i32_50 = arith.constant 0 : i32
      %80 = tpu.memref_slice %arg6[%64, %c1_i32_49, %c0_i32_50] : memref<2x8x128xf32, #tpu.memory_space<vmem>> -> memref<1x1x128xf32, #tpu.memory_space<vmem>>
      %81 = tpu.memref_squeeze %80 : memref<1x1x128xf32, #tpu.memory_space<vmem>> -> memref<1x128xf32, #tpu.memory_space<vmem>>
      %82 = tpu.memref_slice %arg7[%64] : memref<2x!tpu.dma_semaphore, #tpu.memory_space<semaphore_mem>> -> memref<1x!tpu.dma_semaphore, #tpu.memory_space<semaphore_mem>>
      %83 = tpu.memref_squeeze %82 : memref<1x!tpu.dma_semaphore, #tpu.memory_space<semaphore_mem>> -> memref<!tpu.dma_semaphore, #tpu.memory_space<semaphore_mem>>
      tpu.enqueue_dma source(%79 : memref<1x128xf32, #tpu.memory_space<any>>) target(%81 : memref<1x128xf32, #tpu.memory_space<vmem>>) target_semaphore(%83 : memref<!tpu.dma_semaphore, #tpu.memory_space<semaphore_mem>>)
      %c2_i32_51 = arith.constant 2 : i32
      %84 = arith.addi %67, %c2_i32_51 : i32
      %85 = arith.index_cast %84 : i32 to index
      %86 = memref.load %arg2[%85] : memref<16xi32, #tpu.memory_space<smem>>
      %c0_i32_52 = arith.constant 0 : i32
      %87 = tpu.memref_slice %arg3[%86, %c0_i32_52] : memref<32x128xf32, #tpu.memory_space<any>> -> memref<1x128xf32, #tpu.memory_space<any>>
      %c2_i32_53 = arith.constant 2 : i32
      %c0_i32_54 = arith.constant 0 : i32
      %88 = tpu.memref_slice %arg6[%64, %c2_i32_53, %c0_i32_54] : memref<2x8x128xf32, #tpu.memory_space<vmem>> -> memref<1x1x128xf32, #tpu.memory_space<vmem>>
      %89 = tpu.memref_squeeze %88 : memref<1x1x128xf32, #tpu.memory_space<vmem>> -> memref<1x128xf32, #tpu.memory_space<vmem>>
      %90 = tpu.memref_slice %arg7[%64] : memref<2x!tpu.dma_semaphore, #tpu.memory_space<semaphore_mem>> -> memref<1x!tpu.dma_semaphore, #tpu.memory_space<semaphore_mem>>
      %91 = tpu.memref_squeeze %90 : memref<1x!tpu.dma_semaphore, #tpu.memory_space<semaphore_mem>> -> memref<!tpu.dma_semaphore, #tpu.memory_space<semaphore_mem>>
      tpu.enqueue_dma source(%87 : memref<1x128xf32, #tpu.memory_space<any>>) target(%89 : memref<1x128xf32, #tpu.memory_space<vmem>>) target_semaphore(%91 : memref<!tpu.dma_semaphore, #tpu.memory_space<semaphore_mem>>)
      %c3_i32_55 = arith.constant 3 : i32
      %92 = arith.addi %67, %c3_i32_55 : i32
      %93 = arith.index_cast %92 : i32 to index
      %94 = memref.load %arg2[%93] : memref<16xi32, #tpu.memory_space<smem>>
      %c0_i32_56 = arith.constant 0 : i32
      %95 = tpu.memref_slice %arg3[%94, %c0_i32_56] : memref<32x128xf32, #tpu.memory_space<any>> -> memref<1x128xf32, #tpu.memory_space<any>>
      %c3_i32_57 = arith.constant 3 : i32
      %c0_i32_58 = arith.constant 0 : i32
      %96 = tpu.memref_slice %arg6[%64, %c3_i32_57, %c0_i32_58] : memref<2x8x128xf32, #tpu.memory_space<vmem>> -> memref<1x1x128xf32, #tpu.memory_space<vmem>>
      %97 = tpu.memref_squeeze %96 : memref<1x1x128xf32, #tpu.memory_space<vmem>> -> memref<1x128xf32, #tpu.memory_space<vmem>>
      %98 = tpu.memref_slice %arg7[%64] : memref<2x!tpu.dma_semaphore, #tpu.memory_space<semaphore_mem>> -> memref<1x!tpu.dma_semaphore, #tpu.memory_space<semaphore_mem>>
      %99 = tpu.memref_squeeze %98 : memref<1x!tpu.dma_semaphore, #tpu.memory_space<semaphore_mem>> -> memref<!tpu.dma_semaphore, #tpu.memory_space<semaphore_mem>>
      tpu.enqueue_dma source(%95 : memref<1x128xf32, #tpu.memory_space<any>>) target(%97 : memref<1x128xf32, #tpu.memory_space<vmem>>) target_semaphore(%99 : memref<!tpu.dma_semaphore, #tpu.memory_space<semaphore_mem>>)
      %c4_i32_59 = arith.constant 4 : i32
      %100 = arith.addi %67, %c4_i32_59 : i32
      %101 = arith.index_cast %100 : i32 to index
      %102 = memref.load %arg2[%101] : memref<16xi32, #tpu.memory_space<smem>>
      %c0_i32_60 = arith.constant 0 : i32
      %103 = tpu.memref_slice %arg3[%102, %c0_i32_60] : memref<32x128xf32, #tpu.memory_space<any>> -> memref<1x128xf32, #tpu.memory_space<any>>
      %c4_i32_61 = arith.constant 4 : i32
      %c0_i32_62 = arith.constant 0 : i32
      %104 = tpu.memref_slice %arg6[%64, %c4_i32_61, %c0_i32_62] : memref<2x8x128xf32, #tpu.memory_space<vmem>> -> memref<1x1x128xf32, #tpu.memory_space<vmem>>
      %105 = tpu.memref_squeeze %104 : memref<1x1x128xf32, #tpu.memory_space<vmem>> -> memref<1x128xf32, #tpu.memory_space<vmem>>
      %106 = tpu.memref_slice %arg7[%64] : memref<2x!tpu.dma_semaphore, #tpu.memory_space<semaphore_mem>> -> memref<1x!tpu.dma_semaphore, #tpu.memory_space<semaphore_mem>>
      %107 = tpu.memref_squeeze %106 : memref<1x!tpu.dma_semaphore, #tpu.memory_space<semaphore_mem>> -> memref<!tpu.dma_semaphore, #tpu.memory_space<semaphore_mem>>
      tpu.enqueue_dma source(%103 : memref<1x128xf32, #tpu.memory_space<any>>) target(%105 : memref<1x128xf32, #tpu.memory_space<vmem>>) target_semaphore(%107 : memref<!tpu.dma_semaphore, #tpu.memory_space<semaphore_mem>>)
      %c5_i32_63 = arith.constant 5 : i32
      %108 = arith.addi %67, %c5_i32_63 : i32
      %109 = arith.index_cast %108 : i32 to index
      %110 = memref.load %arg2[%109] : memref<16xi32, #tpu.memory_space<smem>>
      %c0_i32_64 = arith.constant 0 : i32
      %111 = tpu.memref_slice %arg3[%110, %c0_i32_64] : memref<32x128xf32, #tpu.memory_space<any>> -> memref<1x128xf32, #tpu.memory_space<any>>
      %c5_i32_65 = arith.constant 5 : i32
      %c0_i32_66 = arith.constant 0 : i32
      %112 = tpu.memref_slice %arg6[%64, %c5_i32_65, %c0_i32_66] : memref<2x8x128xf32, #tpu.memory_space<vmem>> -> memref<1x1x128xf32, #tpu.memory_space<vmem>>
      %113 = tpu.memref_squeeze %112 : memref<1x1x128xf32, #tpu.memory_space<vmem>> -> memref<1x128xf32, #tpu.memory_space<vmem>>
      %114 = tpu.memref_slice %arg7[%64] : memref<2x!tpu.dma_semaphore, #tpu.memory_space<semaphore_mem>> -> memref<1x!tpu.dma_semaphore, #tpu.memory_space<semaphore_mem>>
      %115 = tpu.memref_squeeze %114 : memref<1x!tpu.dma_semaphore, #tpu.memory_space<semaphore_mem>> -> memref<!tpu.dma_semaphore, #tpu.memory_space<semaphore_mem>>
      tpu.enqueue_dma source(%111 : memref<1x128xf32, #tpu.memory_space<any>>) target(%113 : memref<1x128xf32, #tpu.memory_space<vmem>>) target_semaphore(%115 : memref<!tpu.dma_semaphore, #tpu.memory_space<semaphore_mem>>)
      %c6_i32_67 = arith.constant 6 : i32
      %116 = arith.addi %67, %c6_i32_67 : i32
      %117 = arith.index_cast %116 : i32 to index
      %118 = memref.load %arg2[%117] : memref<16xi32, #tpu.memory_space<smem>>
      %c0_i32_68 = arith.constant 0 : i32
      %119 = tpu.memref_slice %arg3[%118, %c0_i32_68] : memref<32x128xf32, #tpu.memory_space<any>> -> memref<1x128xf32, #tpu.memory_space<any>>
      %c6_i32_69 = arith.constant 6 : i32
      %c0_i32_70 = arith.constant 0 : i32
      %120 = tpu.memref_slice %arg6[%64, %c6_i32_69, %c0_i32_70] : memref<2x8x128xf32, #tpu.memory_space<vmem>> -> memref<1x1x128xf32, #tpu.memory_space<vmem>>
      %121 = tpu.memref_squeeze %120 : memref<1x1x128xf32, #tpu.memory_space<vmem>> -> memref<1x128xf32, #tpu.memory_space<vmem>>
      %122 = tpu.memref_slice %arg7[%64] : memref<2x!tpu.dma_semaphore, #tpu.memory_space<semaphore_mem>> -> memref<1x!tpu.dma_semaphore, #tpu.memory_space<semaphore_mem>>
      %123 = tpu.memref_squeeze %122 : memref<1x!tpu.dma_semaphore, #tpu.memory_space<semaphore_mem>> -> memref<!tpu.dma_semaphore, #tpu.memory_space<semaphore_mem>>
      tpu.enqueue_dma source(%119 : memref<1x128xf32, #tpu.memory_space<any>>) target(%121 : memref<1x128xf32, #tpu.memory_space<vmem>>) target_semaphore(%123 : memref<!tpu.dma_semaphore, #tpu.memory_space<semaphore_mem>>)
      %c7_i32_71 = arith.constant 7 : i32
      %124 = arith.addi %67, %c7_i32_71 : i32
      %125 = arith.index_cast %124 : i32 to index
      %126 = memref.load %arg2[%125] : memref<16xi32, #tpu.memory_space<smem>>
      %c0_i32_72 = arith.constant 0 : i32
      %127 = tpu.memref_slice %arg3[%126, %c0_i32_72] : memref<32x128xf32, #tpu.memory_space<any>> -> memref<1x128xf32, #tpu.memory_space<any>>
      %c7_i32_73 = arith.constant 7 : i32
      %c0_i32_74 = arith.constant 0 : i32
      %128 = tpu.memref_slice %arg6[%64, %c7_i32_73, %c0_i32_74] : memref<2x8x128xf32, #tpu.memory_space<vmem>> -> memref<1x1x128xf32, #tpu.memory_space<vmem>>
      %129 = tpu.memref_squeeze %128 : memref<1x1x128xf32, #tpu.memory_space<vmem>> -> memref<1x128xf32, #tpu.memory_space<vmem>>
      %130 = tpu.memref_slice %arg7[%64] : memref<2x!tpu.dma_semaphore, #tpu.memory_space<semaphore_mem>> -> memref<1x!tpu.dma_semaphore, #tpu.memory_space<semaphore_mem>>
      %131 = tpu.memref_squeeze %130 : memref<1x!tpu.dma_semaphore, #tpu.memory_space<semaphore_mem>> -> memref<!tpu.dma_semaphore, #tpu.memory_space<semaphore_mem>>
      tpu.enqueue_dma source(%127 : memref<1x128xf32, #tpu.memory_space<any>>) target(%129 : memref<1x128xf32, #tpu.memory_space<vmem>>) target_semaphore(%131 : memref<!tpu.dma_semaphore, #tpu.memory_space<semaphore_mem>>)
    } else {
    }
    %57 = arith.index_cast %9 : i32 to index
    %c0 = arith.constant 0 : index
    %c0_35 = arith.constant 0 : index
    %58 = vector.load %arg6[%57, %c0, %c0_35] : memref<2x8x128xf32, #tpu.memory_space<vmem>>, vector<1x8x128xf32>
    %59 = vector.shape_cast %58 : vector<1x8x128xf32> to vector<8x128xf32>
    %c0_36 = arith.constant 0 : index
    %c0_37 = arith.constant 0 : index
    %60 = vector.load %arg4[%c0_36, %c0_37] : memref<8x128xf32, #tpu.memory_space<vmem>>, vector<8x128xf32>
    %61 = arith.addf %59, %60 : vector<8x128xf32>
    %c0_38 = arith.constant 0 : index
    %c0_39 = arith.constant 0 : index
    %62 = vector.load %arg5[%c0_38, %c0_39] : memref<8x128xf32, #tpu.memory_space<vmem>>, vector<8x128xf32>
    tpu.vector_store %arg5[%c0_38, %c0_39], %61 {strides = array<i32>} : memref<8x128xf32, #tpu.memory_space<vmem>>, vector<8x128xf32>,
    return
  }
  func.func @transform_1(%arg0: i32, %arg1: i32, %arg2: memref<16xi32, #tpu.memory_space<smem>>) -> (i32, i32) {
    %c0_i32 = arith.constant 0 : i32
    %c0_i32_0 = arith.constant 0 : i32
    return %arg0, %c0_i32 : i32, i32
  }
  func.func @transform_2(%arg0: i32, %arg1: i32, %arg2: memref<16xi32, #tpu.memory_space<smem>>) -> (i32, i32) {
    %c1_i32 = arith.constant 1 : i32
    %0 = arith.muli %arg1, %c1_i32 : i32
    %1 = arith.addi %0, %arg0 : i32
    %c0_i32 = arith.constant 0 : i32
    %c0_i32_0 = arith.constant 0 : i32
    return %1, %c0_i32 : i32, i32
  }
}

</mosaic_0001>

<llo_original>
// kernel: tpu_custom_call.1
$region0: #{tpu_custom_call.1}
  #allocation0 [shape = 'u32[]', space=smem, size = 0x4, offset = 0x4, fixed_abs, tag = 'smem constant byte address 0x4 - core index']
  #allocation1 [shape = 'u32[144,128]{1,0:T(1,128)}', space=vmem, size = 0x12000, scoped, tag = 'internal scratch']
  #allocation2 [shape = 'f32[2,8,128]{2,1,0:T(8,128)}', space=vmem, size = 0x2000, scoped, tag = 'scratch operand']
  #allocation3 [shape = 's32[2]{0}', space=sflag, size = 0x8, scoped, tag = 'scratch operand']
  #allocation4 [shape = 's32[1]{0}', space=sflag, size = 0x4, scoped, tag = 'scoped memory for tpu_custom_call.1']
  #allocation5 [shape = 'u8[512]{0}', space=smem, size = 0x200, scoped, tag = 'prefetched SMEM operand 0']
  #allocation10 [shape = 's32[]', space=sflag, size = 0x4, offset = 0, fixed_abs, tag = 'sflag constant byte address 0x0 - dummy sync flag']
  #allocation11 [shape = 's32[]', space=sflag, size = 0x4, offset = 0, fixed_abs, tag = 'sflag constant byte address 0x0 - dummy sync flag']
  #allocation12 [shape = 'u32[]', space=smem, size = 0x4, offset = 0x44, fixed_abs, tag = 'smem constant byte address 0x44 - assertion arg 0']
  #allocation13 [shape = 'u32[]', space=smem, size = 0x4, offset = 0x48, fixed_abs, tag = 'smem constant byte address 0x48 - assertion arg 1']
  #allocation14 [shape = 's32[]', space=sflag, size = 0x4, offset = 0, fixed_abs, tag = 'sflag constant byte address 0x0 - dummy sync flag']
  #allocation15 [shape = 's32[]', space=sflag, size = 0x4, offset = 0, fixed_abs, tag = 'sflag constant byte address 0x0 - dummy sync flag']
  #allocation16 [shape = 's32[]', space=sflag, size = 0x4, offset = 0, fixed_abs, tag = 'sflag constant byte address 0x0 - dummy sync flag']
  #allocation17 [shape = 's32[]', space=sflag, size = 0x4, offset = 0, fixed_abs, tag = 'sflag constant byte address 0x0 - dummy sync flag']
  #allocation18 [shape = 's32[]', space=sflag, size = 0x4, offset = 0, fixed_abs, tag = 'sflag constant byte address 0x0 - dummy sync flag']
  #allocation19 [shape = 's32[]', space=sflag, size = 0x4, offset = 0, fixed_abs, tag = 'sflag constant byte address 0x0 - dummy sync flag']
  #allocation20 [shape = 's32[]', space=sflag, size = 0x4, offset = 0, fixed_abs, tag = 'sflag constant byte address 0x0 - dummy sync flag']
  #allocation21 [shape = 's32[]', space=sflag, size = 0x4, offset = 0, fixed_abs, tag = 'sflag constant byte address 0x0 - dummy sync flag']
  #allocation22 [shape = 's32[]', space=sflag, size = 0x4, offset = 0, fixed_abs, tag = 'sflag constant byte address 0x0 - dummy sync flag']
  #allocation23 [shape = 's32[]', space=sflag, size = 0x4, offset = 0, fixed_abs, tag = 'sflag constant byte address 0x0 - dummy sync flag']
  #allocation24 [shape = 's32[]', space=sflag, size = 0x4, offset = 0, fixed_abs, tag = 'sflag constant byte address 0x0 - dummy sync flag']
  #allocation25 [shape = 's32[]', space=sflag, size = 0x4, offset = 0, fixed_abs, tag = 'sflag constant byte address 0x0 - dummy sync flag']
  #allocation26 [shape = 's32[]', space=sflag, size = 0x4, offset = 0, fixed_abs, tag = 'sflag constant byte address 0x0 - dummy sync flag']
  #allocation27 [shape = 's32[]', space=sflag, size = 0x4, offset = 0, fixed_abs, tag = 'sflag constant byte address 0x0 - dummy sync flag']
  #allocation28 [shape = 's32[]', space=sflag, size = 0x4, offset = 0, fixed_abs, tag = 'sflag constant byte address 0x0 - dummy sync flag']
  #allocation29 [shape = 's32[]', space=sflag, size = 0x4, offset = 0, fixed_abs, tag = 'sflag constant byte address 0x0 - dummy sync flag']
  #allocation30 [shape = 's32[]', space=sflag, size = 0x4, offset = 0, fixed_abs, tag = 'sflag constant byte address 0x0 - dummy sync flag']
  #allocation31 [shape = 's32[]', space=sflag, size = 0x4, offset = 0, fixed_abs, tag = 'sflag constant byte address 0x0 - dummy sync flag']
  #allocation32 [shape = 's32[]', space=sflag, size = 0x4, offset = 0, fixed_abs, tag = 'sflag constant byte address 0x0 - dummy sync flag']
  #allocation33 [shape = 's32[]', space=sflag, size = 0x4, offset = 0, fixed_abs, tag = 'sflag constant byte address 0x0 - dummy sync flag']
  #allocation34 [shape = 's32[]', space=sflag, size = 0x4, offset = 0, fixed_abs, tag = 'sflag constant byte address 0x0 - dummy sync flag']
  #allocation35 [shape = 's32[]', space=sflag, size = 0x4, offset = 0, fixed_abs, tag = 'sflag constant byte address 0x0 - dummy sync flag']
  #allocation36 [shape = 's32[]', space=sflag, size = 0x4, offset = 0, fixed_abs, tag = 'sflag constant byte address 0x0 - dummy sync flag']
  #allocation37 [shape = 's32[]', space=sflag, size = 0x4, offset = 0, fixed_abs, tag = 'sflag constant byte address 0x0 - dummy sync flag']
  #allocation38 [shape = 's32[]', space=sflag, size = 0x4, offset = 0, fixed_abs, tag = 'sflag constant byte address 0x0 - dummy sync flag']
  #allocation39 [shape = 's32[]', space=sflag, size = 0x4, offset = 0, fixed_abs, tag = 'sflag constant byte address 0x0 - dummy sync flag']
  #allocation40 [shape = 's32[]', space=sflag, size = 0x4, offset = 0, fixed_abs, tag = 'sflag constant byte address 0x0 - dummy sync flag']
  #allocation41 [shape = 's32[]', space=sflag, size = 0x4, offset = 0, fixed_abs, tag = 'sflag constant byte address 0x0 - dummy sync flag']
  #allocation42 [shape = 's32[]', space=sflag, size = 0x4, offset = 0, fixed_abs, tag = 'sflag constant byte address 0x0 - dummy sync flag']
  #allocation43 [shape = 's32[]', space=sflag, size = 0x4, offset = 0, fixed_abs, tag = 'sflag constant byte address 0x0 - dummy sync flag']
  %s0 = inlined_call_operand.hbm [shape: s32[16], index: 0, kind: input, shape index: {}]
  %s1 = inlined_call_operand.hbm [shape: f32[32,128], index: 1, kind: input, shape index: {}]
  %s2 = inlined_call_operand.hbm [shape: f32[8,128], index: 2, kind: input, shape index: {}]
  %s3 = inlined_call_operand.hbm [shape: f32[16,128], index: 3, kind: output, shape index: {}]
  %s4 = sld [smem:[#allocation0]]
  $region113: #{tpu_custom_call.1} parent=0
    _
  %s6 = ssub.s32 1, %s4
  %s7 = scalar_select 0, %s6, %s4
  %9 = dma.hbm_to_smem %s0, 16, [#allocation5], [#allocation4]
  %10 = dma.done [#allocation4], 16
  %11 = sfence
  $region1: #{tpu_custom_call.1} parent=0
    #allocation6 [shape = 'u8[4096]{0}', space=vmem, size = 0x1000, scoped, tag = 'input window, operand 2, single buffered']
    #allocation7 [shape = 's32[2]{0}', space=sflag, size = 0x8, scoped, tag = 'scoped memory for tpu_custom_call.1']
    #allocation8 [shape = 's32[2]{0}', space=sflag, size = 0x8, scoped, tag = 'scoped memory for tpu_custom_call.1']
    #allocation9 [shape = 'u8[8192]{0}', space=vmem, size = 0x2000, scoped, tag = 'output window, operand 0']
    %12 = vsyncpa [#allocation7], 0
    %13 = vsyncpa [#allocation8], 0
    %s14 = scalar_lea.sflag [#allocation8], 1
    %15 = vsyncpa %s14, 0
    loop: start=0, step=1, limit=4
    $region2: #{tpu_custom_call.1} parent=1 // loop_pre_header
      _
    $region3: #{tpu_custom_call.1} parent=1 // loop_header
      %s17 = sphi 0, %s21
      %p18 = scmp.ge.s32.totalorder %s17, 4
      %s24 = sphi 0, %s36
      %s25 = sphi 0, %s32
      %s26 = sphi 0, %s24
      %s27 = sphi 0, %s25
      %s28 = sphi 0, %s26
      %s29 = sphi 0, %s27
      %s39 = sphi 0, %s41
      %s42 = sphi 0, %s39
      %s43 = sphi 0, %s42
      %s59 = sphi 0, %s43
      %s67 = sphi 0, %s69
      %s70 = sphi 0, %s67
      %s71 = sphi 0, %s70
      %s87 = sphi 0, %s71
    $region4: #{tpu_custom_call.1} parent=1 // loop_header_branch
      %20 = sbr.rel (%p18) target = $region8
    $region5: #{tpu_custom_call.1} parent=1 // loop_body
      %s22 = ssub.s32 %s17, 1
      %s23 = ssub.s32 %s17, 2
      %s30 = sadd.s32 1, %s25
      %p31 = scmp.ge.s32.totalorder %s30, 2
      %s32 = scalar_select %p31, 0, %s30
      %s33 = sadd.s32 1, %s24
      %s34 = scalar_select %p31, %s33, %s24
      %p35 = scmp.ge.s32.totalorder %s34, 1
      %s36 = scalar_select %p35, 0, %s34
      %s37 = ssub.s32 %s24, %s36
      %p38 = scmp.eq.s32.totalorder %s37, 0
      %s40 = sadd.s32 %s39, 1
      %s41 = scalar_select %p38, %s39, %s40
      %p44 = pneg %p38
      %p45 = scmp.eq.s32.totalorder %s17, 1
      %p46 = por %p44, %p45
      %p47 = scmp.ne.s32.totalorder %s39, %s42
      %p48 = scmp.eq.s32.totalorder %s17, 0
      %p49 = por %p47, %p48
      %p50 = scmp.ne.s32.totalorder %s39, %s42
      %p51 = scmp.eq.s32.totalorder %s22, 1
      %p52 = por %p50, %p51
      %p53 = scmp.ne.s32.totalorder %s42, %s43
      %p54 = scmp.eq.s32.totalorder %s22, 0
      %p55 = por %p53, %p54
      %p56 = scmp.ne.s32.totalorder %s42, %s43
      %p57 = scmp.eq.s32.totalorder %s23, 1
      %p58 = por %p56, %p57
      %p60 = scmp.ne.s32.totalorder %s43, %s59
      %p61 = scmp.eq.s32.totalorder %s23, 0
      %p62 = por %p60, %p61
      %s63 = sadd.s32 %s25, %s24
      %s64 = sadd.s32 %s32, %s36
      %s65 = ssub.s32 %s63, %s64
      %p66 = scmp.eq.s32.totalorder %s65, 0
      %s68 = sadd.s32 %s67, 1
      %s69 = scalar_select %p66, %s67, %s68
      %p72 = pneg %p66
      %p73 = scmp.eq.s32.totalorder %s17, 1
      %p74 = por %p72, %p73
      %p75 = scmp.ne.s32.totalorder %s67, %s70
      %p76 = scmp.eq.s32.totalorder %s17, 0
      %p77 = por %p75, %p76
      %p78 = scmp.ne.s32.totalorder %s67, %s70
      %p79 = scmp.eq.s32.totalorder %s22, 1
      %p80 = por %p78, %p79
      %p81 = scmp.ne.s32.totalorder %s70, %s71
      %p82 = scmp.eq.s32.totalorder %s22, 0
      %p83 = por %p81, %p82
      %p84 = scmp.ne.s32.totalorder %s70, %s71
      %p85 = scmp.eq.s32.totalorder %s23, 1
      %p86 = por %p84, %p85
      %p88 = scmp.ne.s32.totalorder %s71, %s87
      %p89 = scmp.eq.s32.totalorder %s23, 0
      %p90 = por %p88, %p89
      %p91 = scmp.le.s32.totalorder 1, %s17
      %p92 = scmp.lt.s32.totalorder %s17, 3
      %p93 = pnand %p91, %p92
      %p94 = pneg %p93
      // Predicated region
      $region9: #{tpu_custom_call.1} parent=5 // pred_check
        _
      $region10: #{tpu_custom_call.1} parent=5 // pred_check_branch
        %96 = sbr.rel (%p93) target = $region12
      $region11: #{tpu_custom_call.1} parent=5 // pred_region
        %s97 = ssub.s32 %s17, 1
        // Predicated region
        $region13: #{tpu_custom_call.1} parent=11 // pred_check
          %p98 = pneg %p55
        $region14: #{tpu_custom_call.1} parent=11 // pred_check_branch
          %100 = sbr.rel (%p98) target = $region16
        $region15: #{tpu_custom_call.1} parent=11 // pred_region
          %s102 = ssub.s32 128, 128
          %103 = vsyncadd [#allocation7], %s102
          %s104 = smul.addr %s26, 128
          %s105 = scalar_lea.hbm %s2, %s104
          %s107 = sshll.u32 [#allocation6], 4
          %s108 = int_to_ptr.vmem [resolvable:$true] %s107
          %110 = dma.hbm_to_vmem [thread:$0]  %s105, 128, %s108, [#allocation7]
        $region16: #{tpu_custom_call.1} parent=11 // pred_fallthru
          _
      $region12: #{tpu_custom_call.1} parent=5 // pred_fallthru
        _
      %p111 = scmp.lt.s32.totalorder %s17, 2
      // Predicated region
      $region17: #{tpu_custom_call.1} parent=5 // pred_check
        %p112 = pneg %p111
      $region18: #{tpu_custom_call.1} parent=5 // pred_check_branch
        %114 = sbr.rel (%p112) target = $region20
      $region19: #{tpu_custom_call.1} parent=5 // pred_region
        _
      $region20: #{tpu_custom_call.1} parent=5 // pred_fallthru
        _
      %p115 = scmp.le.s32.totalorder 1, %s17
      %p116 = scmp.lt.s32.totalorder %s17, 3
      %p117 = pnand %p115, %p116
      %p118 = pneg %p117
      // Predicated region
      $region21: #{tpu_custom_call.1} parent=5 // pred_check
        _
      $region22: #{tpu_custom_call.1} parent=5 // pred_check_branch
        %120 = sbr.rel (%p117) target = $region24
      $region23: #{tpu_custom_call.1} parent=5 // pred_region
        %s121 = ssub.s32 %s17, 1
        // Predicated region
        $region25: #{tpu_custom_call.1} parent=23 // pred_check
          %p122 = pneg %p55
        $region26: #{tpu_custom_call.1} parent=23 // pred_check_branch
          %124 = sbr.rel (%p122) target = $region28
        $region27: #{tpu_custom_call.1} parent=23 // pred_region
          %125 = dma.done [#allocation7], 128
        $region28: #{tpu_custom_call.1} parent=23 // pred_fallthru
          _
        %p126 = pneg %p55
        %p127 = pneg %p52
        %p128 = pneg %p83
        %p129 = pneg %p80
        %s130 = sand.u32 %s70, 1
        %s131 = scalar_lea.sflag [#allocation8], %s130
        %s132 = sand.u32 %s70, 1
        %s133 = smul.addr %s132, 8
        %s134 = scalar_lea.vmem [#allocation9], %s133
        %s135 = sadd.s32 %s27, %s26
        %p136 = scmp.lt.s32.totalorder %s27, 0
        %s137 = ssub.s32 0, %s27
        %s138 = scalar_select %p136, %s137, %s27
        %s139 = sand.u32 %s138, 1
        %s140 = ssub.s32 0, %s139
        %s141 = scalar_select %p136, %s140, %s139
        %p142 = scmp.ne.s32.totalorder %s141, 0
        %p143 = scmp.lt.s32.totalorder %s141, 0
        %p144 = pnand %p143, %p142
        %p145 = pneg %p144
        %s146 = sadd.s32 %s141, 2
        %s147 = scalar_select %p145, %s146, %s141
        %p148 = scmp.eq.s32.totalorder %s27, 0
        // Predicated region
        $region29: #{tpu_custom_call.1} parent=23 // pred_check
          %p149 = pneg %p148
        $region30: #{tpu_custom_call.1} parent=23 // pred_check_branch
          %151 = sbr.rel (%p149) target = $region32
        $region31: #{tpu_custom_call.1} parent=23 // pred_region
          %s152 = smul.u32 %s27, 8
          %s153 = smul.u32 %s26, 8
          %s154 = sadd.s32 %s152, %s153
          %s155 = sld [smem:[#allocation5 + %s154]]
          %s156 = smul.addr %s155, 16
          %s157 = scalar_lea.hbm %s1, %s156
          %s158 = smul.u32 %s147, 8
          %s159 = scalar_lea.vmem [#allocation2], %s158
          %s160 = scalar_lea.sflag [#allocation3], %s147
          // Predicated region
          $region33: #{tpu_custom_call.1} parent=31 // pred_check
            _
          $region34: #{tpu_custom_call.1} parent=31 // pred_check_branch
            %162 = sbr.rel target = $region36
          $region35: #{tpu_custom_call.1} parent=31 // pred_region
            %163 = sst [smem:[#allocation12]] [#allocation11]
            %164 = sst [smem:[#allocation13]] [#allocation10]
          $region36: #{tpu_custom_call.1} parent=31 // pred_fallthru
            _
          %166 = shalt.err (0)
          %s168 = sshll.u32 %s159, 4
          %s169 = int_to_ptr.vmem [resolvable:$true] %s168
          %171 = dma.hbm_to_vmem [thread:$0]  %s157, 16, %s169, %s160
          %s172 = sadd.s32 %s154, 1
          %s173 = sld [smem:[#allocation5 + %s172]]
          %s174 = smul.addr %s173, 16
          %s175 = scalar_lea.hbm %s1, %s174
          %s176 = sadd.s32 1, %s158
          %s177 = scalar_lea.vmem [#allocation2], %s176
          // Predicated region
          $region37: #{tpu_custom_call.1} parent=31 // pred_check
            _
          $region38: #{tpu_custom_call.1} parent=31 // pred_check_branch
            %179 = sbr.rel target = $region40
          $region39: #{tpu_custom_call.1} parent=31 // pred_region
            %180 = sst [smem:[#allocation12]] [#allocation15]
            %181 = sst [smem:[#allocation13]] [#allocation14]
          $region40: #{tpu_custom_call.1} parent=31 // pred_fallthru
            _
          %183 = shalt.err (0)
          %s185 = sshll.u32 %s177, 4
          %s186 = int_to_ptr.vmem [resolvable:$true] %s185
          %188 = dma.hbm_to_vmem [thread:$0]  %s175, 16, %s186, %s160
          %s189 = sadd.s32 %s154, 2
          %s190 = sld [smem:[#allocation5 + %s189]]
          %s191 = smul.addr %s190, 16
          %s192 = scalar_lea.hbm %s1, %s191
          %s193 = sadd.s32 2, %s158
          %s194 = scalar_lea.vmem [#allocation2], %s193
          // Predicated region
          $region41: #{tpu_custom_call.1} parent=31 // pred_check
            _
          $region42: #{tpu_custom_call.1} parent=31 // pred_check_branch
            %196 = sbr.rel target = $region44
          $region43: #{tpu_custom_call.1} parent=31 // pred_region
            %197 = sst [smem:[#allocation12]] [#allocation17]
            %198 = sst [smem:[#allocation13]] [#allocation16]
          $region44: #{tpu_custom_call.1} parent=31 // pred_fallthru
            _
          %200 = shalt.err (0)
          %s202 = sshll.u32 %s194, 4
          %s203 = int_to_ptr.vmem [resolvable:$true] %s202
          %205 = dma.hbm_to_vmem [thread:$0]  %s192, 16, %s203, %s160
          %s206 = sadd.s32 %s154, 3
          %s207 = sld [smem:[#allocation5 + %s206]]
          %s208 = smul.addr %s207, 16
          %s209 = scalar_lea.hbm %s1, %s208
          %s210 = sadd.s32 3, %s158
          %s211 = scalar_lea.vmem [#allocation2], %s210
          // Predicated region
          $region45: #{tpu_custom_call.1} parent=31 // pred_check
            _
          $region46: #{tpu_custom_call.1} parent=31 // pred_check_branch
            %213 = sbr.rel target = $region48
          $region47: #{tpu_custom_call.1} parent=31 // pred_region
            %214 = sst [smem:[#allocation12]] [#allocation19]
            %215 = sst [smem:[#allocation13]] [#allocation18]
          $region48: #{tpu_custom_call.1} parent=31 // pred_fallthru
            _
          %217 = shalt.err (0)
          %s219 = sshll.u32 %s211, 4
          %s220 = int_to_ptr.vmem [resolvable:$true] %s219
          %222 = dma.hbm_to_vmem [thread:$0]  %s209, 16, %s220, %s160
          %s223 = sadd.s32 %s154, 4
          %s224 = sld [smem:[#allocation5 + %s223]]
          %s225 = smul.addr %s224, 16
          %s226 = scalar_lea.hbm %s1, %s225
          %s227 = sadd.s32 4, %s158
          %s228 = scalar_lea.vmem [#allocation2], %s227
          // Predicated region
          $region49: #{tpu_custom_call.1} parent=31 // pred_check
            _
          $region50: #{tpu_custom_call.1} parent=31 // pred_check_branch
            %230 = sbr.rel target = $region52
          $region51: #{tpu_custom_call.1} parent=31 // pred_region
            %231 = sst [smem:[#allocation12]] [#allocation21]
            %232 = sst [smem:[#allocation13]] [#allocation20]
          $region52: #{tpu_custom_call.1} parent=31 // pred_fallthru
            _
          %234 = shalt.err (0)
          %s236 = sshll.u32 %s228, 4
          %s237 = int_to_ptr.vmem [resolvable:$true] %s236
          %239 = dma.hbm_to_vmem [thread:$0]  %s226, 16, %s237, %s160
          %s240 = sadd.s32 %s154, 5
          %s241 = sld [smem:[#allocation5 + %s240]]
          %s242 = smul.addr %s241, 16
          %s243 = scalar_lea.hbm %s1, %s242
          %s244 = sadd.s32 5, %s158
          %s245 = scalar_lea.vmem [#allocation2], %s244
          // Predicated region
          $region53: #{tpu_custom_call.1} parent=31 // pred_check
            _
          $region54: #{tpu_custom_call.1} parent=31 // pred_check_branch
            %247 = sbr.rel target = $region56
          $region55: #{tpu_custom_call.1} parent=31 // pred_region
            %248 = sst [smem:[#allocation12]] [#allocation23]
            %249 = sst [smem:[#allocation13]] [#allocation22]
          $region56: #{tpu_custom_call.1} parent=31 // pred_fallthru
            _
          %251 = shalt.err (0)
          %s253 = sshll.u32 %s245, 4
          %s254 = int_to_ptr.vmem [resolvable:$true] %s253
          %256 = dma.hbm_to_vmem [thread:$0]  %s243, 16, %s254, %s160
          %s257 = sadd.s32 %s154, 6
          %s258 = sld [smem:[#allocation5 + %s257]]
          %s259 = smul.addr %s258, 16
          %s260 = scalar_lea.hbm %s1, %s259
          %s261 = sadd.s32 6, %s158
          %s262 = scalar_lea.vmem [#allocation2], %s261
          // Predicated region
          $region57: #{tpu_custom_call.1} parent=31 // pred_check
            _
          $region58: #{tpu_custom_call.1} parent=31 // pred_check_branch
            %264 = sbr.rel target = $region60
          $region59: #{tpu_custom_call.1} parent=31 // pred_region
            %265 = sst [smem:[#allocation12]] [#allocation25]
            %266 = sst [smem:[#allocation13]] [#allocation24]
          $region60: #{tpu_custom_call.1} parent=31 // pred_fallthru
            _
          %268 = shalt.err (0)
          %s270 = sshll.u32 %s262, 4
          %s271 = int_to_ptr.vmem [resolvable:$true] %s270
          %273 = dma.hbm_to_vmem [thread:$0]  %s260, 16, %s271, %s160
          %s274 = sadd.s32 %s154, 7
          %s275 = sld [smem:[#allocation5 + %s274]]
          %s276 = smul.addr %s275, 16
          %s277 = scalar_lea.hbm %s1, %s276
          %s278 = sadd.s32 7, %s158
          %s279 = scalar_lea.vmem [#allocation2], %s278
          // Predicated region
          $region61: #{tpu_custom_call.1} parent=31 // pred_check
            _
          $region62: #{tpu_custom_call.1} parent=31 // pred_check_branch
            %281 = sbr.rel target = $region64
          $region63: #{tpu_custom_call.1} parent=31 // pred_region
            %282 = sst [smem:[#allocation12]] [#allocation27]
            %283 = sst [smem:[#allocation13]] [#allocation26]
          $region64: #{tpu_custom_call.1} parent=31 // pred_fallthru
            _
          %285 = shalt.err (0)
          %s287 = sshll.u32 %s279, 4
          %s288 = int_to_ptr.vmem [resolvable:$true] %s287
          %290 = dma.hbm_to_vmem [thread:$0]  %s277, 16, %s288, %s160
        $region32: #{tpu_custom_call.1} parent=23 // pred_fallthru
          _
        %s291 = scalar_lea.sflag [#allocation3], %s147
        %s292 = smul.u32 1, 1
        %s293 = sshll.u32 %s292, 4
        %294 = dma.done %s291, %s293
        %s295 = sshll.u32 %s292, 4
        %296 = dma.done %s291, %s295
        %s297 = sshll.u32 %s292, 4
        %298 = dma.done %s291, %s297
        %s299 = sshll.u32 %s292, 4
        %300 = dma.done %s291, %s299
        %s301 = sshll.u32 %s292, 4
        %302 = dma.done %s291, %s301
        %s303 = sshll.u32 %s292, 4
        %304 = dma.done %s291, %s303
        %s305 = sshll.u32 %s292, 4
        %306 = dma.done %s291, %s305
        %s307 = sshll.u32 %s292, 4
        %308 = dma.done %s291, %s307
        %s309 = sadd.s32 %s27, 1
        %p310 = scmp.lt.s32.totalorder %s309, 2
        // Predicated region
        $region65: #{tpu_custom_call.1} parent=23 // pred_check
          %p311 = pneg %p310
        $region66: #{tpu_custom_call.1} parent=23 // pred_check_branch
          %313 = sbr.rel (%p311) target = $region68
        $region67: #{tpu_custom_call.1} parent=23 // pred_region
          %s314 = ssub.s32 1, %s147
          %s315 = smul.u32 %s309, 8
          %s316 = smul.u32 %s26, 8
          %s317 = sadd.s32 %s315, %s316
          %s318 = sld [smem:[#allocation5 + %s317]]
          %s319 = smul.addr %s318, 16
          %s320 = scalar_lea.hbm %s1, %s319
          %s321 = smul.u32 %s314, 8
          %s322 = scalar_lea.vmem [#allocation2], %s321
          %s323 = scalar_lea.sflag [#allocation3], %s314
          // Predicated region
          $region69: #{tpu_custom_call.1} parent=67 // pred_check
            _
          $region70: #{tpu_custom_call.1} parent=67 // pred_check_branch
            %325 = sbr.rel target = $region72
          $region71: #{tpu_custom_call.1} parent=67 // pred_region
            %326 = sst [smem:[#allocation12]] [#allocation29]
            %327 = sst [smem:[#allocation13]] [#allocation28]
          $region72: #{tpu_custom_call.1} parent=67 // pred_fallthru
            _
          %329 = shalt.err (0)
          %s331 = sshll.u32 %s322, 4
          %s332 = int_to_ptr.vmem [resolvable:$true] %s331
          %334 = dma.hbm_to_vmem [thread:$0]  %s320, 16, %s332, %s323
          %s335 = sadd.s32 %s317, 1
          %s336 = sld [smem:[#allocation5 + %s335]]
          %s337 = smul.addr %s336, 16
          %s338 = scalar_lea.hbm %s1, %s337
          %s339 = sadd.s32 1, %s321
          %s340 = scalar_lea.vmem [#allocation2], %s339
          // Predicated region
          $region73: #{tpu_custom_call.1} parent=67 // pred_check
            _
          $region74: #{tpu_custom_call.1} parent=67 // pred_check_branch
            %342 = sbr.rel target = $region76
          $region75: #{tpu_custom_call.1} parent=67 // pred_region
            %343 = sst [smem:[#allocation12]] [#allocation31]
            %344 = sst [smem:[#allocation13]] [#allocation30]
          $region76: #{tpu_custom_call.1} parent=67 // pred_fallthru
            _
          %346 = shalt.err (0)
          %s348 = sshll.u32 %s340, 4
          %s349 = int_to_ptr.vmem [resolvable:$true] %s348
          %351 = dma.hbm_to_vmem [thread:$0]  %s338, 16, %s349, %s323
          %s352 = sadd.s32 %s317, 2
          %s353 = sld [smem:[#allocation5 + %s352]]
          %s354 = smul.addr %s353, 16
          %s355 = scalar_lea.hbm %s1, %s354
          %s356 = sadd.s32 2, %s321
          %s357 = scalar_lea.vmem [#allocation2], %s356
          // Predicated region
          $region77: #{tpu_custom_call.1} parent=67 // pred_check
            _
          $region78: #{tpu_custom_call.1} parent=67 // pred_check_branch
            %359 = sbr.rel target = $region80
          $region79: #{tpu_custom_call.1} parent=67 // pred_region
            %360 = sst [smem:[#allocation12]] [#allocation33]
            %361 = sst [smem:[#allocation13]] [#allocation32]
          $region80: #{tpu_custom_call.1} parent=67 // pred_fallthru
            _
          %363 = shalt.err (0)
          %s365 = sshll.u32 %s357, 4
          %s366 = int_to_ptr.vmem [resolvable:$true] %s365
          %368 = dma.hbm_to_vmem [thread:$0]  %s355, 16, %s366, %s323
          %s369 = sadd.s32 %s317, 3
          %s370 = sld [smem:[#allocation5 + %s369]]
          %s371 = smul.addr %s370, 16
          %s372 = scalar_lea.hbm %s1, %s371
          %s373 = sadd.s32 3, %s321
          %s374 = scalar_lea.vmem [#allocation2], %s373
          // Predicated region
          $region81: #{tpu_custom_call.1} parent=67 // pred_check
            _
          $region82: #{tpu_custom_call.1} parent=67 // pred_check_branch
            %376 = sbr.rel target = $region84
          $region83: #{tpu_custom_call.1} parent=67 // pred_region
            %377 = sst [smem:[#allocation12]] [#allocation35]
            %378 = sst [smem:[#allocation13]] [#allocation34]
          $region84: #{tpu_custom_call.1} parent=67 // pred_fallthru
            _
          %380 = shalt.err (0)
          %s382 = sshll.u32 %s374, 4
          %s383 = int_to_ptr.vmem [resolvable:$true] %s382
          %385 = dma.hbm_to_vmem [thread:$0]  %s372, 16, %s383, %s323
          %s386 = sadd.s32 %s317, 4
          %s387 = sld [smem:[#allocation5 + %s386]]
          %s388 = smul.addr %s387, 16
          %s389 = scalar_lea.hbm %s1, %s388
          %s390 = sadd.s32 4, %s321
          %s391 = scalar_lea.vmem [#allocation2], %s390
          // Predicated region
          $region85: #{tpu_custom_call.1} parent=67 // pred_check
            _
          $region86: #{tpu_custom_call.1} parent=67 // pred_check_branch
            %393 = sbr.rel target = $region88
          $region87: #{tpu_custom_call.1} parent=67 // pred_region
            %394 = sst [smem:[#allocation12]] [#allocation37]
            %395 = sst [smem:[#allocation13]] [#allocation36]
          $region88: #{tpu_custom_call.1} parent=67 // pred_fallthru
            _
          %397 = shalt.err (0)
          %s399 = sshll.u32 %s391, 4
          %s400 = int_to_ptr.vmem [resolvable:$true] %s399
          %402 = dma.hbm_to_vmem [thread:$0]  %s389, 16, %s400, %s323
          %s403 = sadd.s32 %s317, 5
          %s404 = sld [smem:[#allocation5 + %s403]]
          %s405 = smul.addr %s404, 16
          %s406 = scalar_lea.hbm %s1, %s405
          %s407 = sadd.s32 5, %s321
          %s408 = scalar_lea.vmem [#allocation2], %s407
          // Predicated region
          $region89: #{tpu_custom_call.1} parent=67 // pred_check
            _
          $region90: #{tpu_custom_call.1} parent=67 // pred_check_branch
            %410 = sbr.rel target = $region92
          $region91: #{tpu_custom_call.1} parent=67 // pred_region
            %411 = sst [smem:[#allocation12]] [#allocation39]
            %412 = sst [smem:[#allocation13]] [#allocation38]
          $region92: #{tpu_custom_call.1} parent=67 // pred_fallthru
            _
          %414 = shalt.err (0)
          %s416 = sshll.u32 %s408, 4
          %s417 = int_to_ptr.vmem [resolvable:$true] %s416
          %419 = dma.hbm_to_vmem [thread:$0]  %s406, 16, %s417, %s323
          %s420 = sadd.s32 %s317, 6
          %s421 = sld [smem:[#allocation5 + %s420]]
          %s422 = smul.addr %s421, 16
          %s423 = scalar_lea.hbm %s1, %s422
          %s424 = sadd.s32 6, %s321
          %s425 = scalar_lea.vmem [#allocation2], %s424
          // Predicated region
          $region93: #{tpu_custom_call.1} parent=67 // pred_check
            _
          $region94: #{tpu_custom_call.1} parent=67 // pred_check_branch
            %427 = sbr.rel target = $region96
          $region95: #{tpu_custom_call.1} parent=67 // pred_region
            %428 = sst [smem:[#allocation12]] [#allocation41]
            %429 = sst [smem:[#allocation13]] [#allocation40]
          $region96: #{tpu_custom_call.1} parent=67 // pred_fallthru
            _
          %431 = shalt.err (0)
          %s433 = sshll.u32 %s425, 4
          %s434 = int_to_ptr.vmem [resolvable:$true] %s433
          %436 = dma.hbm_to_vmem [thread:$0]  %s423, 16, %s434, %s323
          %s437 = sadd.s32 %s317, 7
          %s438 = sld [smem:[#allocation5 + %s437]]
          %s439 = smul.addr %s438, 16
          %s440 = scalar_lea.hbm %s1, %s439
          %s441 = sadd.s32 7, %s321
          %s442 = scalar_lea.vmem [#allocation2], %s441
          // Predicated region
          $region97: #{tpu_custom_call.1} parent=67 // pred_check
            _
          $region98: #{tpu_custom_call.1} parent=67 // pred_check_branch
            %444 = sbr.rel target = $region100
          $region99: #{tpu_custom_call.1} parent=67 // pred_region
            %445 = sst [smem:[#allocation12]] [#allocation43]
            %446 = sst [smem:[#allocation13]] [#allocation42]
          $region100: #{tpu_custom_call.1} parent=67 // pred_fallthru
            _
          %448 = shalt.err (0)
          %s450 = sshll.u32 %s442, 4
          %s451 = int_to_ptr.vmem [resolvable:$true] %s450
          %453 = dma.hbm_to_vmem [thread:$0]  %s440, 16, %s451, %s323
        $region68: #{tpu_custom_call.1} parent=23 // pred_fallthru
          _
        %s454 = smul.u32 %s147, 8
        %s455 = scalar_lea.vmem [#allocation2], %s454
        %v456 = vld [vmem:[%s455] sm:$0xff]
        %v457 = vld [vmem:[#allocation6] sm:$0xff]
        %v458 = vadd.f32 %v456, %v457
        %459 = vst [vmem:[%s134] sm:$0xff] %v458
        %s460 = sand.u32 %s70, 1
        %s461 = scalar_lea.sflag [#allocation8], %s460
        %s462 = sand.u32 %s70, 1
        %s463 = smul.addr %s462, 8
        %s464 = scalar_lea.vmem [#allocation9], %s463
        // Predicated region
        $region101: #{tpu_custom_call.1} parent=23 // pred_check
          %p465 = pneg %p80
        $region102: #{tpu_custom_call.1} parent=23 // pred_check_branch
          %467 = sbr.rel (%p465) target = $region104
        $region103: #{tpu_custom_call.1} parent=23 // pred_region
          %s468 = sadd.s32 %s27, %s26
          %s470 = ssub.s32 128, 128
          %471 = vsyncadd %s461, %s470
          %s472 = smul.addr %s468, 128
          %s473 = scalar_lea.hbm %s3, %s472
          %s475 = sshll.u32 %s464, 4
          %s476 = int_to_ptr.vmem [resolvable:$true] %s475
          %478 = dma.vmem_to_hbm [thread:$0]  %s476, 128, %s473, %s461
        $region104: #{tpu_custom_call.1} parent=23 // pred_fallthru
          _
      $region24: #{tpu_custom_call.1} parent=5 // pred_fallthru
        _
      %p479 = scmp.le.s32.totalorder 2, %s17
      // Predicated region
      $region105: #{tpu_custom_call.1} parent=5 // pred_check
        %p480 = pneg %p479
      $region106: #{tpu_custom_call.1} parent=5 // pred_check_branch
        %482 = sbr.rel (%p480) target = $region108
      $region107: #{tpu_custom_call.1} parent=5 // pred_region
        %s483 = ssub.s32 %s17, 2
        // Predicated region
        $region109: #{tpu_custom_call.1} parent=107 // pred_check
          %p484 = pneg %p86
        $region110: #{tpu_custom_call.1} parent=107 // pred_check_branch
          %486 = sbr.rel (%p484) target = $region112
        $region111: #{tpu_custom_call.1} parent=107 // pred_region
          %s487 = sand.u32 %s71, 1
          %s488 = scalar_lea.sflag [#allocation8], %s487
          %s489 = sand.u32 %s71, 1
          %s490 = smul.addr %s489, 8
          %s491 = scalar_lea.vmem [#allocation9], %s490
          %492 = dma.done %s488, 128
        $region112: #{tpu_custom_call.1} parent=107 // pred_fallthru
          _
      $region108: #{tpu_custom_call.1} parent=5 // pred_fallthru
        _
    $region6: #{tpu_custom_call.1} parent=1 // loop_footer
      %s21 = sadd.s32 1, %s17
    $region7: #{tpu_custom_call.1} parent=1 // loop_footer_branch
      %16 = sbr.rel target = $region3
    $region8: #{tpu_custom_call.1} parent=1 // loop_exit
      _
    %493 = vsyncpa [#allocation7], 1
    %s494 = scalar_lea.sflag [#allocation7], 1
    %495 = vsyncpa %s494, 1
    %496 = vsyncpa [#allocation8], 1
    %s497 = scalar_lea.sflag [#allocation8], 1
    %498 = vsyncpa %s497, 1
  %499 = vsyncmov [#allocation3]
  %s500 = vpop.sfrf %499
  %p501 = scmp.eq.s32.totalorder %s500, 0
  %p502 = pneg %p501
  %504 = shalt.err (%p502)
  %s505 = scalar_lea.sflag [#allocation3], 1
  %506 = vsyncmov %s505
  %s507 = vpop.sfrf %506
  %p508 = scmp.eq.s32.totalorder %s507, 0
  %p509 = pneg %p508
  %511 = shalt.err (%p509)

</llo_original>
